<compile_context>
chip_gen: v5e
topology: v5e:2x2
jax: 0.10.0
libtpu: 0.0.40
codegen_flags: <defaults>
</compile_context>

<pallas_src>
import functools

import jax
import jax.numpy as jnp
import numpy as np
from jax.experimental import pallas as pl
from jax.experimental.pallas import tpu as pltpu


def _features_embedding_kernel(num_fields, block_b, idx_ref, table_ref, out_ref):
    # idx_ref:   (B_padded * F,) int32  SMEM (scalar prefetch), combined indices
    # table_ref: (V, D)          f32    VMEM-resident embedding table
    # out_ref:   (block_b, F*D)  f32    lane-dense output tile for this grid step
    b0 = pl.program_id(0) * block_b
    rows = []
    for r in range(block_b):                       # static unroll (block_b == 8)
        base = (b0 + r) * num_fields               # scalar index math (sreg)
        parts = []
        for f in range(num_fields):
            row_id = idx_ref[base + f]             # scalar read from SMEM
            parts.append(table_ref[pl.ds(row_id, 1), :])   # (1, D) dynamic row load
        rows.append(jnp.concatenate(parts, axis=-1))        # (1, F*D) lane concat
    out_ref[...] = jnp.concatenate(rows, axis=0)             # single aligned (8, 128) store


def features_embedding(x, offsets, table, *, block_b=8):
    """x: (B, F) int, offsets: (F,) int, table: (V, D) f32 -> (B, F, D) f32."""
    B, F = x.shape
    V, D = table.shape

    # Offset add hoisted out of the kernel (trivial elementwise work).
    idx = x.astype(jnp.int32) + offsets.astype(jnp.int32)[None, :]       # (B, F)

    # Pad the batch to a multiple of the batch tile; padded rows gather row 0
    # and are sliced away below.
    b_padded = ((B + block_b - 1) // block_b) * block_b
    if b_padded != B:
        idx = jnp.pad(idx, ((0, b_padded - B), (0, 0)))
    idx_flat = idx.reshape(b_padded * F)          # 1-D => compact SMEM layout

    kernel = functools.partial(_features_embedding_kernel, F, block_b)

    out_flat = pl.pallas_call(
        kernel,
        out_shape=jax.ShapeDtypeStruct((b_padded, F * D), table.dtype),
        grid_spec=pltpu.PrefetchScalarGridSpec(
            num_scalar_prefetch=1,                # idx_flat -> SMEM, drives the gather
            grid=(b_padded // block_b,),
            in_specs=[
                # Full table: block index (0, 0) every step => DMA'd to VMEM once,
                # then resident across all grid steps.
                pl.BlockSpec((V, D), lambda i, idx_ref: (0, 0)),
            ],
            out_specs=pl.BlockSpec((block_b, F * D), lambda i, idx_ref: (i, 0)),
        ),
        compiler_params=pltpu.CompilerParams(
            dimension_semantics=("parallel",),     # batch tiles shard across TCs on v7x
            vmem_limit_bytes=32 * 1024 * 1024,     # explicit scoped-VMEM budget (all gens)
        ),
    )(idx_flat, table)

    # TODO(synk): for vocabularies too large for VMEM, keep the table in HBM
    # (memory_space=pl.ANY) and gather rows with pltpu.make_async_copy
    # (double-buffered per-row DMA) instead of keeping the table resident.

    return out_flat[:B].reshape(B, F, D)


if __name__ == "__main__":
    # Module hyper-params (synthetic, deterministic, small).
    field_dims = (8, 16, 24, 16)          # sum = 64 rows in the embedding table
    embed_dim = 32                        # F * D = 4 * 32 = 128 lanes (lane-dense output)
    batch = 16
    num_fields = len(field_dims)
    vocab = int(sum(field_dims))

    # offsets = (0, *cumsum(field_dims)[:-1]) -- exactly as in the module.
    offsets = jnp.asarray(
        np.concatenate(([0], np.cumsum(field_dims)[:-1])).astype(np.int32))

    key = jax.random.PRNGKey(0)
    k_w, k_x = jax.random.split(key)

    # Xavier-uniform init of the embedding weight, shape (sum(field_dims), embed_dim).
    bound = float(np.sqrt(6.0 / (vocab + embed_dim)))
    table = jax.random.uniform(k_w, (vocab, embed_dim),
                               dtype=jnp.float32, minval=-bound, maxval=bound)

    # Per-field indices in [0, field_dims[f]).
    cols = []
    for fd in field_dims:
        k_x, k_f = jax.random.split(k_x)
        cols.append(jax.random.randint(k_f, (batch, 1), 0, fd, dtype=jnp.int32))
    x = jnp.concatenate(cols, axis=1)      # (batch, num_fields) int32

    out = features_embedding(x, offsets, table)
    jax.block_until_ready(out)

    # Reference (plain JAX) check of the forward semantics.
    ref = jnp.take(table, x + offsets[None, :], axis=0)
    assert out.shape == (batch, num_fields, embed_dim)
    assert jnp.allclose(out, ref, atol=1e-6), "mismatch vs reference gather"

    print("KERNEL_OK")
</pallas_src>

<mosaic_0001>
module attributes {stable_mosaic.version = 11 : i64} {
  func.func @_features_embedding_kernel(%arg0: i32, %arg1: memref<64xi32, #tpu.memory_space<smem>>, %arg2: memref<64x32xf32, #tpu.memory_space<vmem>>, %arg3: memref<8x128xf32, #tpu.memory_space<vmem>>) attributes {dimension_semantics = [#tpu.dimension_semantics<parallel>], iteration_bounds = array<i64: 2>, scalar_prefetch = 1 : i64, scratch_operands = 0 : i64, tpu.core_type = #tpu.core_type<tc>, window_params = [{pipeline_mode = #tpu.pipeline_mode<synchronous>, transform_indices = @transform_0, window_bounds = array<i64: 64, 32>}, {transform_indices = @transform_1, window_bounds = array<i64: 8, 128>}]} {
    %c8_i32 = arith.constant 8 : i32
    %0 = arith.muli %arg0, %c8_i32 : i32
    %c0_i32 = arith.constant 0 : i32
    %1 = arith.addi %0, %c0_i32 : i32
    %c4_i32 = arith.constant 4 : i32
    %2 = arith.muli %1, %c4_i32 : i32
    %c0_i32_0 = arith.constant 0 : i32
    %3 = arith.addi %2, %c0_i32_0 : i32
    %4 = arith.index_cast %3 : i32 to index
    %5 = memref.load %arg1[%4] : memref<64xi32, #tpu.memory_space<smem>>
    %6 = arith.index_cast %5 : i32 to index
    %c0 = arith.constant 0 : index
    %7 = vector.load %arg2[%6, %c0] : memref<64x32xf32, #tpu.memory_space<vmem>>, vector<1x32xf32>
    %c1_i32 = arith.constant 1 : i32
    %8 = arith.addi %2, %c1_i32 : i32
    %9 = arith.index_cast %8 : i32 to index
    %10 = memref.load %arg1[%9] : memref<64xi32, #tpu.memory_space<smem>>
    %11 = arith.index_cast %10 : i32 to index
    %c0_1 = arith.constant 0 : index
    %12 = vector.load %arg2[%11, %c0_1] : memref<64x32xf32, #tpu.memory_space<vmem>>, vector<1x32xf32>
    %c2_i32 = arith.constant 2 : i32
    %13 = arith.addi %2, %c2_i32 : i32
    %14 = arith.index_cast %13 : i32 to index
    %15 = memref.load %arg1[%14] : memref<64xi32, #tpu.memory_space<smem>>
    %16 = arith.index_cast %15 : i32 to index
    %c0_2 = arith.constant 0 : index
    %17 = vector.load %arg2[%16, %c0_2] : memref<64x32xf32, #tpu.memory_space<vmem>>, vector<1x32xf32>
    %c3_i32 = arith.constant 3 : i32
    %18 = arith.addi %2, %c3_i32 : i32
    %19 = arith.index_cast %18 : i32 to index
    %20 = memref.load %arg1[%19] : memref<64xi32, #tpu.memory_space<smem>>
    %21 = arith.index_cast %20 : i32 to index
    %c0_3 = arith.constant 0 : index
    %22 = vector.load %arg2[%21, %c0_3] : memref<64x32xf32, #tpu.memory_space<vmem>>, vector<1x32xf32>
    %23 = tpu.concatenate %7, %12, %17, %22 in 1 : vector<1x32xf32>, vector<1x32xf32>, vector<1x32xf32>, vector<1x32xf32> -> vector<1x128xf32>
    %c1_i32_4 = arith.constant 1 : i32
    %24 = arith.addi %0, %c1_i32_4 : i32
    %c4_i32_5 = arith.constant 4 : i32
    %25 = arith.muli %24, %c4_i32_5 : i32
    %c0_i32_6 = arith.constant 0 : i32
    %26 = arith.addi %25, %c0_i32_6 : i32
    %27 = arith.index_cast %26 : i32 to index
    %28 = memref.load %arg1[%27] : memref<64xi32, #tpu.memory_space<smem>>
    %29 = arith.index_cast %28 : i32 to index
    %c0_7 = arith.constant 0 : index
    %30 = vector.load %arg2[%29, %c0_7] : memref<64x32xf32, #tpu.memory_space<vmem>>, vector<1x32xf32>
    %c1_i32_8 = arith.constant 1 : i32
    %31 = arith.addi %25, %c1_i32_8 : i32
    %32 = arith.index_cast %31 : i32 to index
    %33 = memref.load %arg1[%32] : memref<64xi32, #tpu.memory_space<smem>>
    %34 = arith.index_cast %33 : i32 to index
    %c0_9 = arith.constant 0 : index
    %35 = vector.load %arg2[%34, %c0_9] : memref<64x32xf32, #tpu.memory_space<vmem>>, vector<1x32xf32>
    %c2_i32_10 = arith.constant 2 : i32
    %36 = arith.addi %25, %c2_i32_10 : i32
    %37 = arith.index_cast %36 : i32 to index
    %38 = memref.load %arg1[%37] : memref<64xi32, #tpu.memory_space<smem>>
    %39 = arith.index_cast %38 : i32 to index
    %c0_11 = arith.constant 0 : index
    %40 = vector.load %arg2[%39, %c0_11] : memref<64x32xf32, #tpu.memory_space<vmem>>, vector<1x32xf32>
    %c3_i32_12 = arith.constant 3 : i32
    %41 = arith.addi %25, %c3_i32_12 : i32
    %42 = arith.index_cast %41 : i32 to index
    %43 = memref.load %arg1[%42] : memref<64xi32, #tpu.memory_space<smem>>
    %44 = arith.index_cast %43 : i32 to index
    %c0_13 = arith.constant 0 : index
    %45 = vector.load %arg2[%44, %c0_13] : memref<64x32xf32, #tpu.memory_space<vmem>>, vector<1x32xf32>
    %46 = tpu.concatenate %30, %35, %40, %45 in 1 : vector<1x32xf32>, vector<1x32xf32>, vector<1x32xf32>, vector<1x32xf32> -> vector<1x128xf32>
    %c2_i32_14 = arith.constant 2 : i32
    %47 = arith.addi %0, %c2_i32_14 : i32
    %c4_i32_15 = arith.constant 4 : i32
    %48 = arith.muli %47, %c4_i32_15 : i32
    %c0_i32_16 = arith.constant 0 : i32
    %49 = arith.addi %48, %c0_i32_16 : i32
    %50 = arith.index_cast %49 : i32 to index
    %51 = memref.load %arg1[%50] : memref<64xi32, #tpu.memory_space<smem>>
    %52 = arith.index_cast %51 : i32 to index
    %c0_17 = arith.constant 0 : index
    %53 = vector.load %arg2[%52, %c0_17] : memref<64x32xf32, #tpu.memory_space<vmem>>, vector<1x32xf32>
    %c1_i32_18 = arith.constant 1 : i32
    %54 = arith.addi %48, %c1_i32_18 : i32
    %55 = arith.index_cast %54 : i32 to index
    %56 = memref.load %arg1[%55] : memref<64xi32, #tpu.memory_space<smem>>
    %57 = arith.index_cast %56 : i32 to index
    %c0_19 = arith.constant 0 : index
    %58 = vector.load %arg2[%57, %c0_19] : memref<64x32xf32, #tpu.memory_space<vmem>>, vector<1x32xf32>
    %c2_i32_20 = arith.constant 2 : i32
    %59 = arith.addi %48, %c2_i32_20 : i32
    %60 = arith.index_cast %59 : i32 to index
    %61 = memref.load %arg1[%60] : memref<64xi32, #tpu.memory_space<smem>>
    %62 = arith.index_cast %61 : i32 to index
    %c0_21 = arith.constant 0 : index
    %63 = vector.load %arg2[%62, %c0_21] : memref<64x32xf32, #tpu.memory_space<vmem>>, vector<1x32xf32>
    %c3_i32_22 = arith.constant 3 : i32
    %64 = arith.addi %48, %c3_i32_22 : i32
    %65 = arith.index_cast %64 : i32 to index
    %66 = memref.load %arg1[%65] : memref<64xi32, #tpu.memory_space<smem>>
    %67 = arith.index_cast %66 : i32 to index
    %c0_23 = arith.constant 0 : index
    %68 = vector.load %arg2[%67, %c0_23] : memref<64x32xf32, #tpu.memory_space<vmem>>, vector<1x32xf32>
    %69 = tpu.concatenate %53, %58, %63, %68 in 1 : vector<1x32xf32>, vector<1x32xf32>, vector<1x32xf32>, vector<1x32xf32> -> vector<1x128xf32>
    %c3_i32_24 = arith.constant 3 : i32
    %70 = arith.addi %0, %c3_i32_24 : i32
    %c4_i32_25 = arith.constant 4 : i32
    %71 = arith.muli %70, %c4_i32_25 : i32
    %c0_i32_26 = arith.constant 0 : i32
    %72 = arith.addi %71, %c0_i32_26 : i32
    %73 = arith.index_cast %72 : i32 to index
    %74 = memref.load %arg1[%73] : memref<64xi32, #tpu.memory_space<smem>>
    %75 = arith.index_cast %74 : i32 to index
    %c0_27 = arith.constant 0 : index
    %76 = vector.load %arg2[%75, %c0_27] : memref<64x32xf32, #tpu.memory_space<vmem>>, vector<1x32xf32>
    %c1_i32_28 = arith.constant 1 : i32
    %77 = arith.addi %71, %c1_i32_28 : i32
    %78 = arith.index_cast %77 : i32 to index
    %79 = memref.load %arg1[%78] : memref<64xi32, #tpu.memory_space<smem>>
    %80 = arith.index_cast %79 : i32 to index
    %c0_29 = arith.constant 0 : index
    %81 = vector.load %arg2[%80, %c0_29] : memref<64x32xf32, #tpu.memory_space<vmem>>, vector<1x32xf32>
    %c2_i32_30 = arith.constant 2 : i32
    %82 = arith.addi %71, %c2_i32_30 : i32
    %83 = arith.index_cast %82 : i32 to index
    %84 = memref.load %arg1[%83] : memref<64xi32, #tpu.memory_space<smem>>
    %85 = arith.index_cast %84 : i32 to index
    %c0_31 = arith.constant 0 : index
    %86 = vector.load %arg2[%85, %c0_31] : memref<64x32xf32, #tpu.memory_space<vmem>>, vector<1x32xf32>
    %c3_i32_32 = arith.constant 3 : i32
    %87 = arith.addi %71, %c3_i32_32 : i32
    %88 = arith.index_cast %87 : i32 to index
    %89 = memref.load %arg1[%88] : memref<64xi32, #tpu.memory_space<smem>>
    %90 = arith.index_cast %89 : i32 to index
    %c0_33 = arith.constant 0 : index
    %91 = vector.load %arg2[%90, %c0_33] : memref<64x32xf32, #tpu.memory_space<vmem>>, vector<1x32xf32>
    %92 = tpu.concatenate %76, %81, %86, %91 in 1 : vector<1x32xf32>, vector<1x32xf32>, vector<1x32xf32>, vector<1x32xf32> -> vector<1x128xf32>
    %c4_i32_34 = arith.constant 4 : i32
    %93 = arith.addi %0, %c4_i32_34 : i32
    %c4_i32_35 = arith.constant 4 : i32
    %94 = arith.muli %93, %c4_i32_35 : i32
    %c0_i32_36 = arith.constant 0 : i32
    %95 = arith.addi %94, %c0_i32_36 : i32
    %96 = arith.index_cast %95 : i32 to index
    %97 = memref.load %arg1[%96] : memref<64xi32, #tpu.memory_space<smem>>
    %98 = arith.index_cast %97 : i32 to index
    %c0_37 = arith.constant 0 : index
    %99 = vector.load %arg2[%98, %c0_37] : memref<64x32xf32, #tpu.memory_space<vmem>>, vector<1x32xf32>
    %c1_i32_38 = arith.constant 1 : i32
    %100 = arith.addi %94, %c1_i32_38 : i32
    %101 = arith.index_cast %100 : i32 to index
    %102 = memref.load %arg1[%101] : memref<64xi32, #tpu.memory_space<smem>>
    %103 = arith.index_cast %102 : i32 to index
    %c0_39 = arith.constant 0 : index
    %104 = vector.load %arg2[%103, %c0_39] : memref<64x32xf32, #tpu.memory_space<vmem>>, vector<1x32xf32>
    %c2_i32_40 = arith.constant 2 : i32
    %105 = arith.addi %94, %c2_i32_40 : i32
    %106 = arith.index_cast %105 : i32 to index
    %107 = memref.load %arg1[%106] : memref<64xi32, #tpu.memory_space<smem>>
    %108 = arith.index_cast %107 : i32 to index
    %c0_41 = arith.constant 0 : index
    %109 = vector.load %arg2[%108, %c0_41] : memref<64x32xf32, #tpu.memory_space<vmem>>, vector<1x32xf32>
    %c3_i32_42 = arith.constant 3 : i32
    %110 = arith.addi %94, %c3_i32_42 : i32
    %111 = arith.index_cast %110 : i32 to index
    %112 = memref.load %arg1[%111] : memref<64xi32, #tpu.memory_space<smem>>
    %113 = arith.index_cast %112 : i32 to index
    %c0_43 = arith.constant 0 : index
    %114 = vector.load %arg2[%113, %c0_43] : memref<64x32xf32, #tpu.memory_space<vmem>>, vector<1x32xf32>
    %115 = tpu.concatenate %99, %104, %109, %114 in 1 : vector<1x32xf32>, vector<1x32xf32>, vector<1x32xf32>, vector<1x32xf32> -> vector<1x128xf32>
    %c5_i32 = arith.constant 5 : i32
    %116 = arith.addi %0, %c5_i32 : i32
    %c4_i32_44 = arith.constant 4 : i32
    %117 = arith.muli %116, %c4_i32_44 : i32
    %c0_i32_45 = arith.constant 0 : i32
    %118 = arith.addi %117, %c0_i32_45 : i32
    %119 = arith.index_cast %118 : i32 to index
    %120 = memref.load %arg1[%119] : memref<64xi32, #tpu.memory_space<smem>>
    %121 = arith.index_cast %120 : i32 to index
    %c0_46 = arith.constant 0 : index
    %122 = vector.load %arg2[%121, %c0_46] : memref<64x32xf32, #tpu.memory_space<vmem>>, vector<1x32xf32>
    %c1_i32_47 = arith.constant 1 : i32
    %123 = arith.addi %117, %c1_i32_47 : i32
    %124 = arith.index_cast %123 : i32 to index
    %125 = memref.load %arg1[%124] : memref<64xi32, #tpu.memory_space<smem>>
    %126 = arith.index_cast %125 : i32 to index
    %c0_48 = arith.constant 0 : index
    %127 = vector.load %arg2[%126, %c0_48] : memref<64x32xf32, #tpu.memory_space<vmem>>, vector<1x32xf32>
    %c2_i32_49 = arith.constant 2 : i32
    %128 = arith.addi %117, %c2_i32_49 : i32
    %129 = arith.index_cast %128 : i32 to index
    %130 = memref.load %arg1[%129] : memref<64xi32, #tpu.memory_space<smem>>
    %131 = arith.index_cast %130 : i32 to index
    %c0_50 = arith.constant 0 : index
    %132 = vector.load %arg2[%131, %c0_50] : memref<64x32xf32, #tpu.memory_space<vmem>>, vector<1x32xf32>
    %c3_i32_51 = arith.constant 3 : i32
    %133 = arith.addi %117, %c3_i32_51 : i32
    %134 = arith.index_cast %133 : i32 to index
    %135 = memref.load %arg1[%134] : memref<64xi32, #tpu.memory_space<smem>>
    %136 = arith.index_cast %135 : i32 to index
    %c0_52 = arith.constant 0 : index
    %137 = vector.load %arg2[%136, %c0_52] : memref<64x32xf32, #tpu.memory_space<vmem>>, vector<1x32xf32>
    %138 = tpu.concatenate %122, %127, %132, %137 in 1 : vector<1x32xf32>, vector<1x32xf32>, vector<1x32xf32>, vector<1x32xf32> -> vector<1x128xf32>
    %c6_i32 = arith.constant 6 : i32
    %139 = arith.addi %0, %c6_i32 : i32
    %c4_i32_53 = arith.constant 4 : i32
    %140 = arith.muli %139, %c4_i32_53 : i32
    %c0_i32_54 = arith.constant 0 : i32
    %141 = arith.addi %140, %c0_i32_54 : i32
    %142 = arith.index_cast %141 : i32 to index
    %143 = memref.load %arg1[%142] : memref<64xi32, #tpu.memory_space<smem>>
    %144 = arith.index_cast %143 : i32 to index
    %c0_55 = arith.constant 0 : index
    %145 = vector.load %arg2[%144, %c0_55] : memref<64x32xf32, #tpu.memory_space<vmem>>, vector<1x32xf32>
    %c1_i32_56 = arith.constant 1 : i32
    %146 = arith.addi %140, %c1_i32_56 : i32
    %147 = arith.index_cast %146 : i32 to index
    %148 = memref.load %arg1[%147] : memref<64xi32, #tpu.memory_space<smem>>
    %149 = arith.index_cast %148 : i32 to index
    %c0_57 = arith.constant 0 : index
    %150 = vector.load %arg2[%149, %c0_57] : memref<64x32xf32, #tpu.memory_space<vmem>>, vector<1x32xf32>
    %c2_i32_58 = arith.constant 2 : i32
    %151 = arith.addi %140, %c2_i32_58 : i32
    %152 = arith.index_cast %151 : i32 to index
    %153 = memref.load %arg1[%152] : memref<64xi32, #tpu.memory_space<smem>>
    %154 = arith.index_cast %153 : i32 to index
    %c0_59 = arith.constant 0 : index
    %155 = vector.load %arg2[%154, %c0_59] : memref<64x32xf32, #tpu.memory_space<vmem>>, vector<1x32xf32>
    %c3_i32_60 = arith.constant 3 : i32
    %156 = arith.addi %140, %c3_i32_60 : i32
    %157 = arith.index_cast %156 : i32 to index
    %158 = memref.load %arg1[%157] : memref<64xi32, #tpu.memory_space<smem>>
    %159 = arith.index_cast %158 : i32 to index
    %c0_61 = arith.constant 0 : index
    %160 = vector.load %arg2[%159, %c0_61] : memref<64x32xf32, #tpu.memory_space<vmem>>, vector<1x32xf32>
    %161 = tpu.concatenate %145, %150, %155, %160 in 1 : vector<1x32xf32>, vector<1x32xf32>, vector<1x32xf32>, vector<1x32xf32> -> vector<1x128xf32>
    %c7_i32 = arith.constant 7 : i32
    %162 = arith.addi %0, %c7_i32 : i32
    %c4_i32_62 = arith.constant 4 : i32
    %163 = arith.muli %162, %c4_i32_62 : i32
    %c0_i32_63 = arith.constant 0 : i32
    %164 = arith.addi %163, %c0_i32_63 : i32
    %165 = arith.index_cast %164 : i32 to index
    %166 = memref.load %arg1[%165] : memref<64xi32, #tpu.memory_space<smem>>
    %167 = arith.index_cast %166 : i32 to index
    %c0_64 = arith.constant 0 : index
    %168 = vector.load %arg2[%167, %c0_64] : memref<64x32xf32, #tpu.memory_space<vmem>>, vector<1x32xf32>
    %c1_i32_65 = arith.constant 1 : i32
    %169 = arith.addi %163, %c1_i32_65 : i32
    %170 = arith.index_cast %169 : i32 to index
    %171 = memref.load %arg1[%170] : memref<64xi32, #tpu.memory_space<smem>>
    %172 = arith.index_cast %171 : i32 to index
    %c0_66 = arith.constant 0 : index
    %173 = vector.load %arg2[%172, %c0_66] : memref<64x32xf32, #tpu.memory_space<vmem>>, vector<1x32xf32>
    %c2_i32_67 = arith.constant 2 : i32
    %174 = arith.addi %163, %c2_i32_67 : i32
    %175 = arith.index_cast %174 : i32 to index
    %176 = memref.load %arg1[%175] : memref<64xi32, #tpu.memory_space<smem>>
    %177 = arith.index_cast %176 : i32 to index
    %c0_68 = arith.constant 0 : index
    %178 = vector.load %arg2[%177, %c0_68] : memref<64x32xf32, #tpu.memory_space<vmem>>, vector<1x32xf32>
    %c3_i32_69 = arith.constant 3 : i32
    %179 = arith.addi %163, %c3_i32_69 : i32
    %180 = arith.index_cast %179 : i32 to index
    %181 = memref.load %arg1[%180] : memref<64xi32, #tpu.memory_space<smem>>
    %182 = arith.index_cast %181 : i32 to index
    %c0_70 = arith.constant 0 : index
    %183 = vector.load %arg2[%182, %c0_70] : memref<64x32xf32, #tpu.memory_space<vmem>>, vector<1x32xf32>
    %184 = tpu.concatenate %168, %173, %178, %183 in 1 : vector<1x32xf32>, vector<1x32xf32>, vector<1x32xf32>, vector<1x32xf32> -> vector<1x128xf32>
    %185 = tpu.concatenate %23, %46, %69, %92, %115, %138, %161, %184 in 0 : vector<1x128xf32>, vector<1x128xf32>, vector<1x128xf32>, vector<1x128xf32>, vector<1x128xf32>, vector<1x128xf32>, vector<1x128xf32>, vector<1x128xf32> -> vector<8x128xf32>
    %c0_71 = arith.constant 0 : index
    %c0_72 = arith.constant 0 : index
    %186 = vector.load %arg3[%c0_71, %c0_72] : memref<8x128xf32, #tpu.memory_space<vmem>>, vector<8x128xf32>
    tpu.vector_store %arg3[%c0_71, %c0_72], %185 {strides = array<i32>} : memref<8x128xf32, #tpu.memory_space<vmem>>, vector<8x128xf32>,
    return
  }
  func.func @transform_0(%arg0: i32, %arg1: memref<64xi32, #tpu.memory_space<smem>>) -> (i32, i32) {
    %c0_i32 = arith.constant 0 : i32
    %c0_i32_0 = arith.constant 0 : i32
    %c0_i32_1 = arith.constant 0 : i32
    return %c0_i32, %c0_i32_0 : i32, i32
  }
  func.func @transform_1(%arg0: i32, %arg1: memref<64xi32, #tpu.memory_space<smem>>) -> (i32, i32) {
    %c0_i32 = arith.constant 0 : i32
    %c0_i32_0 = arith.constant 0 : i32
    return %arg0, %c0_i32 : i32, i32
  }
}

</mosaic_0001>

<llo_original>
// kernel: tpu_custom_call.1
$region0: #{tpu_custom_call.1}
  #allocation0 [shape = 'u32[]', space=smem, size = 0x4, offset = 0x4, fixed_abs, tag = 'smem constant byte address 0x4 - core index']
  #allocation1 [shape = 'u32[72,128]{1,0:T(1,128)}', space=vmem, size = 0x9000, scoped, tag = 'internal scratch']
  #allocation2 [shape = 's32[1]{0}', space=sflag, size = 0x4, scoped, tag = 'scoped memory for tpu_custom_call.1']
  #allocation3 [shape = 'u8[512]{0}', space=smem, size = 0x200, scoped, tag = 'prefetched SMEM operand 0']
  %s0 = inlined_call_operand.vmem [shape: s32[64], index: 0, kind: input, shape index: {}]
  %s1 = inlined_call_operand.vmem [shape: f32[64,32], index: 1, kind: input, shape index: {}]
  %s2 = inlined_call_operand.hbm [shape: f32[16,128], index: 2, kind: output, shape index: {}]
  %s3 = sld [smem:[#allocation0]]
  $region37: #{tpu_custom_call.1} parent=0
    _
  %s5 = ssub.s32 1, %s3
  %s6 = scalar_select 0, %s5, %s3
  %s8 = sshll.u32 %s0, 4
  %s9 = int_to_ptr.vmem [resolvable:$true] %s8
  %11 = dma.vmem_to_smem %s9, 16, [#allocation3], [#allocation2]
  %13 = dma.done [#allocation2], 16
  %14 = sfence
  $region1: #{tpu_custom_call.1} parent=0
    #allocation4 [shape = 'u8[8192]{0}', space=vmem, size = 0x2000, scoped, tag = 'output window, operand 0']
    #allocation5 [shape = 's32[2]{0}', space=sflag, size = 0x8, scoped, tag = 'scoped memory for tpu_custom_call.1']
    %15 = vsyncpa [#allocation5], 0
    %s16 = scalar_lea.sflag [#allocation5], 1
    %17 = vsyncpa %s16, 0
    loop: start=0, step=1, limit=4
    $region2: #{tpu_custom_call.1} parent=1 // loop_pre_header
      _
    $region3: #{tpu_custom_call.1} parent=1 // loop_header
      %s19 = sphi 0, %s23
      %p20 = scmp.ge.s32.totalorder %s19, 4
      %s27 = sphi 0, %s27
      %s29 = sphi 0, %s27
      %s30 = sphi 0, %s29
      %s44 = sphi 0, %s30
      %s50 = sphi 0, %s52
      %s53 = sphi 0, %s50
      %s54 = sphi 0, %s53
      %s70 = sphi 0, %s54
    $region4: #{tpu_custom_call.1} parent=1 // loop_header_branch
      %22 = sbr.rel (%p20) target = $region8
    $region5: #{tpu_custom_call.1} parent=1 // loop_body
      %s24 = ssub.s32 %s19, 1
      %s25 = ssub.s32 %s19, 2
      %s26 = sadd.s32 %s19, 1
      %s28 = sadd.s32 %s27, 1
      %p31 = scmp.eq.s32.totalorder %s19, 1
      %p32 = scmp.ne.s32.totalorder %s27, %s29
      %p33 = scmp.eq.s32.totalorder %s19, 0
      %p34 = por %p32, %p33
      %p35 = scmp.ne.s32.totalorder %s27, %s29
      %p36 = scmp.eq.s32.totalorder %s24, 1
      %p37 = por %p35, %p36
      %p38 = scmp.ne.s32.totalorder %s29, %s30
      %p39 = scmp.eq.s32.totalorder %s24, 0
      %p40 = por %p38, %p39
      %p41 = scmp.ne.s32.totalorder %s29, %s30
      %p42 = scmp.eq.s32.totalorder %s25, 1
      %p43 = por %p41, %p42
      %p45 = scmp.ne.s32.totalorder %s30, %s44
      %p46 = scmp.eq.s32.totalorder %s25, 0
      %p47 = por %p45, %p46
      %s48 = ssub.s32 %s19, %s26
      %p49 = scmp.eq.s32.totalorder %s48, 0
      %s51 = sadd.s32 %s50, 1
      %s52 = scalar_select %p49, %s50, %s51
      %p55 = pneg %p49
      %p56 = scmp.eq.s32.totalorder %s19, 1
      %p57 = por %p55, %p56
      %p58 = scmp.ne.s32.totalorder %s50, %s53
      %p59 = scmp.eq.s32.totalorder %s19, 0
      %p60 = por %p58, %p59
      %p61 = scmp.ne.s32.totalorder %s50, %s53
      %p62 = scmp.eq.s32.totalorder %s24, 1
      %p63 = por %p61, %p62
      %p64 = scmp.ne.s32.totalorder %s53, %s54
      %p65 = scmp.eq.s32.totalorder %s24, 0
      %p66 = por %p64, %p65
      %p67 = scmp.ne.s32.totalorder %s53, %s54
      %p68 = scmp.eq.s32.totalorder %s25, 1
      %p69 = por %p67, %p68
      %p71 = scmp.ne.s32.totalorder %s54, %s70
      %p72 = scmp.eq.s32.totalorder %s25, 0
      %p73 = por %p71, %p72
      %p74 = scmp.le.s32.totalorder 1, %s19
      %p75 = scmp.lt.s32.totalorder %s19, 3
      %p76 = pnand %p74, %p75
      %p77 = pneg %p76
      // Predicated region
      $region9: #{tpu_custom_call.1} parent=5 // pred_check
        _
      $region10: #{tpu_custom_call.1} parent=5 // pred_check_branch
        %79 = sbr.rel (%p76) target = $region12
      $region11: #{tpu_custom_call.1} parent=5 // pred_region
        %s80 = ssub.s32 %s19, 1
        // Predicated region
        $region13: #{tpu_custom_call.1} parent=11 // pred_check
          %p81 = pneg %p40
        $region14: #{tpu_custom_call.1} parent=11 // pred_check_branch
          %83 = sbr.rel (%p81) target = $region16
        $region15: #{tpu_custom_call.1} parent=11 // pred_region
          _
        $region16: #{tpu_custom_call.1} parent=11 // pred_fallthru
          _
      $region12: #{tpu_custom_call.1} parent=5 // pred_fallthru
        _
      %p84 = scmp.lt.s32.totalorder %s19, 2
      // Predicated region
      $region17: #{tpu_custom_call.1} parent=5 // pred_check
        %p85 = pneg %p84
      $region18: #{tpu_custom_call.1} parent=5 // pred_check_branch
        %87 = sbr.rel (%p85) target = $region20
      $region19: #{tpu_custom_call.1} parent=5 // pred_region
        _
      $region20: #{tpu_custom_call.1} parent=5 // pred_fallthru
        _
      %p88 = scmp.le.s32.totalorder 1, %s19
      %p89 = scmp.lt.s32.totalorder %s19, 3
      %p90 = pnand %p88, %p89
      %p91 = pneg %p90
      // Predicated region
      $region21: #{tpu_custom_call.1} parent=5 // pred_check
        _
      $region22: #{tpu_custom_call.1} parent=5 // pred_check_branch
        %93 = sbr.rel (%p90) target = $region24
      $region23: #{tpu_custom_call.1} parent=5 // pred_region
        %s94 = ssub.s32 %s19, 1
        %p95 = pneg %p40
        %p96 = pneg %p37
        %p97 = pneg %p66
        %p98 = pneg %p63
        %s99 = sand.u32 %s53, 1
        %s100 = scalar_lea.sflag [#allocation5], %s99
        %s101 = sand.u32 %s53, 1
        %s102 = smul.addr %s101, 8
        %s103 = scalar_lea.vmem [#allocation4], %s102
        %s104 = smul.u32 %s24, 8
        %s105 = smul.u32 %s24, 32
        %s106 = sld [smem:[#allocation3 + %s105]]
        %s107 = scalar_lea.vmem %s1, %s106
        %v108 = vld [vmem:[%s107] sm:$0x1]
        %s109 = sadd.s32 %s105, 1
        %s110 = sld [smem:[#allocation3 + %s109]]
        %s111 = scalar_lea.vmem %s1, %s110
        %v112 = vld [vmem:[%s111] sm:$0x1]
        %s113 = sadd.s32 %s105, 2
        %s114 = sld [smem:[#allocation3 + %s113]]
        %s115 = scalar_lea.vmem %s1, %s114
        %v116 = vld [vmem:[%s115] sm:$0x1]
        %s117 = sadd.s32 %s105, 3
        %s118 = sld [smem:[#allocation3 + %s117]]
        %s119 = scalar_lea.vmem %s1, %s118
        %v120 = vld [vmem:[%s119] sm:$0x1]
        %122 = vrot.lane.b32.xlu0 %v112, 32
        %v123 = vpop.permute.xlu0 %122
        %126 = vrot.lane.b32.xlu0 %v116, 64
        %v127 = vpop.permute.xlu0 %126
        %130 = vrot.lane.b32.xlu0 %v120, 96
        %v131 = vpop.permute.xlu0 %130
        %vm133 = vcmask 261120
        %v134 = vsel %vm133, %v108, %v123
        %vm135 = vcmask 523264
        %v136 = vsel %vm135, %v134, %v127
        %vm137 = vcmask 785408
        %v138 = vsel %vm137, %v136, %v131
        %s139 = sadd.s32 %s104, 1
        %s140 = smul.u32 %s139, 4
        %s141 = sld [smem:[#allocation3 + %s140]]
        %s142 = scalar_lea.vmem %s1, %s141
        %v143 = vld [vmem:[%s142] sm:$0x1]
        %s144 = sadd.s32 %s140, 1
        %s145 = sld [smem:[#allocation3 + %s144]]
        %s146 = scalar_lea.vmem %s1, %s145
        %v147 = vld [vmem:[%s146] sm:$0x1]
        %s148 = sadd.s32 %s140, 2
        %s149 = sld [smem:[#allocation3 + %s148]]
        %s150 = scalar_lea.vmem %s1, %s149
        %v151 = vld [vmem:[%s150] sm:$0x1]
        %s152 = sadd.s32 %s140, 3
        %s153 = sld [smem:[#allocation3 + %s152]]
        %s154 = scalar_lea.vmem %s1, %s153
        %v155 = vld [vmem:[%s154] sm:$0x1]
        %157 = vrot.lane.b32.xlu0 %v147, 32
        %v158 = vpop.permute.xlu0 %157
        %161 = vrot.lane.b32.xlu0 %v151, 64
        %v162 = vpop.permute.xlu0 %161
        %165 = vrot.lane.b32.xlu0 %v155, 96
        %v166 = vpop.permute.xlu0 %165
        %v168 = vsel %vm133, %v143, %v158
        %v169 = vsel %vm135, %v168, %v162
        %v170 = vsel %vm137, %v169, %v166
        %s171 = sadd.s32 %s104, 2
        %s172 = smul.u32 %s171, 4
        %s173 = sld [smem:[#allocation3 + %s172]]
        %s174 = scalar_lea.vmem %s1, %s173
        %v175 = vld [vmem:[%s174] sm:$0x1]
        %s176 = sadd.s32 %s172, 1
        %s177 = sld [smem:[#allocation3 + %s176]]
        %s178 = scalar_lea.vmem %s1, %s177
        %v179 = vld [vmem:[%s178] sm:$0x1]
        %s180 = sadd.s32 %s172, 2
        %s181 = sld [smem:[#allocation3 + %s180]]
        %s182 = scalar_lea.vmem %s1, %s181
        %v183 = vld [vmem:[%s182] sm:$0x1]
        %s184 = sadd.s32 %s172, 3
        %s185 = sld [smem:[#allocation3 + %s184]]
        %s186 = scalar_lea.vmem %s1, %s185
        %v187 = vld [vmem:[%s186] sm:$0x1]
        %189 = vrot.lane.b32.xlu0 %v179, 32
        %v190 = vpop.permute.xlu0 %189
        %193 = vrot.lane.b32.xlu0 %v183, 64
        %v194 = vpop.permute.xlu0 %193
        %197 = vrot.lane.b32.xlu0 %v187, 96
        %v198 = vpop.permute.xlu0 %197
        %v200 = vsel %vm133, %v175, %v190
        %v201 = vsel %vm135, %v200, %v194
        %v202 = vsel %vm137, %v201, %v198
        %s203 = sadd.s32 %s104, 3
        %s204 = smul.u32 %s203, 4
        %s205 = sld [smem:[#allocation3 + %s204]]
        %s206 = scalar_lea.vmem %s1, %s205
        %v207 = vld [vmem:[%s206] sm:$0x1]
        %s208 = sadd.s32 %s204, 1
        %s209 = sld [smem:[#allocation3 + %s208]]
        %s210 = scalar_lea.vmem %s1, %s209
        %v211 = vld [vmem:[%s210] sm:$0x1]
        %s212 = sadd.s32 %s204, 2
        %s213 = sld [smem:[#allocation3 + %s212]]
        %s214 = scalar_lea.vmem %s1, %s213
        %v215 = vld [vmem:[%s214] sm:$0x1]
        %s216 = sadd.s32 %s204, 3
        %s217 = sld [smem:[#allocation3 + %s216]]
        %s218 = scalar_lea.vmem %s1, %s217
        %v219 = vld [vmem:[%s218] sm:$0x1]
        %221 = vrot.lane.b32.xlu0 %v211, 32
        %v222 = vpop.permute.xlu0 %221
        %225 = vrot.lane.b32.xlu0 %v215, 64
        %v226 = vpop.permute.xlu0 %225
        %229 = vrot.lane.b32.xlu0 %v219, 96
        %v230 = vpop.permute.xlu0 %229
        %v232 = vsel %vm133, %v207, %v222
        %v233 = vsel %vm135, %v232, %v226
        %v234 = vsel %vm137, %v233, %v230
        %s235 = sadd.s32 %s104, 4
        %s236 = smul.u32 %s235, 4
        %s237 = sld [smem:[#allocation3 + %s236]]
        %s238 = scalar_lea.vmem %s1, %s237
        %v239 = vld [vmem:[%s238] sm:$0x1]
        %s240 = sadd.s32 %s236, 1
        %s241 = sld [smem:[#allocation3 + %s240]]
        %s242 = scalar_lea.vmem %s1, %s241
        %v243 = vld [vmem:[%s242] sm:$0x1]
        %s244 = sadd.s32 %s236, 2
        %s245 = sld [smem:[#allocation3 + %s244]]
        %s246 = scalar_lea.vmem %s1, %s245
        %v247 = vld [vmem:[%s246] sm:$0x1]
        %s248 = sadd.s32 %s236, 3
        %s249 = sld [smem:[#allocation3 + %s248]]
        %s250 = scalar_lea.vmem %s1, %s249
        %v251 = vld [vmem:[%s250] sm:$0x1]
        %253 = vrot.lane.b32.xlu0 %v243, 32
        %v254 = vpop.permute.xlu0 %253
        %257 = vrot.lane.b32.xlu0 %v247, 64
        %v258 = vpop.permute.xlu0 %257
        %261 = vrot.lane.b32.xlu0 %v251, 96
        %v262 = vpop.permute.xlu0 %261
        %v264 = vsel %vm133, %v239, %v254
        %v265 = vsel %vm135, %v264, %v258
        %v266 = vsel %vm137, %v265, %v262
        %s267 = sadd.s32 %s104, 5
        %s268 = smul.u32 %s267, 4
        %s269 = sld [smem:[#allocation3 + %s268]]
        %s270 = scalar_lea.vmem %s1, %s269
        %v271 = vld [vmem:[%s270] sm:$0x1]
        %s272 = sadd.s32 %s268, 1
        %s273 = sld [smem:[#allocation3 + %s272]]
        %s274 = scalar_lea.vmem %s1, %s273
        %v275 = vld [vmem:[%s274] sm:$0x1]
        %s276 = sadd.s32 %s268, 2
        %s277 = sld [smem:[#allocation3 + %s276]]
        %s278 = scalar_lea.vmem %s1, %s277
        %v279 = vld [vmem:[%s278] sm:$0x1]
        %s280 = sadd.s32 %s268, 3
        %s281 = sld [smem:[#allocation3 + %s280]]
        %s282 = scalar_lea.vmem %s1, %s281
        %v283 = vld [vmem:[%s282] sm:$0x1]
        %285 = vrot.lane.b32.xlu0 %v275, 32
        %v286 = vpop.permute.xlu0 %285
        %289 = vrot.lane.b32.xlu0 %v279, 64
        %v290 = vpop.permute.xlu0 %289
        %293 = vrot.lane.b32.xlu0 %v283, 96
        %v294 = vpop.permute.xlu0 %293
        %v296 = vsel %vm133, %v271, %v286
        %v297 = vsel %vm135, %v296, %v290
        %v298 = vsel %vm137, %v297, %v294
        %s299 = sadd.s32 %s104, 6
        %s300 = smul.u32 %s299, 4
        %s301 = sld [smem:[#allocation3 + %s300]]
        %s302 = scalar_lea.vmem %s1, %s301
        %v303 = vld [vmem:[%s302] sm:$0x1]
        %s304 = sadd.s32 %s300, 1
        %s305 = sld [smem:[#allocation3 + %s304]]
        %s306 = scalar_lea.vmem %s1, %s305
        %v307 = vld [vmem:[%s306] sm:$0x1]
        %s308 = sadd.s32 %s300, 2
        %s309 = sld [smem:[#allocation3 + %s308]]
        %s310 = scalar_lea.vmem %s1, %s309
        %v311 = vld [vmem:[%s310] sm:$0x1]
        %s312 = sadd.s32 %s300, 3
        %s313 = sld [smem:[#allocation3 + %s312]]
        %s314 = scalar_lea.vmem %s1, %s313
        %v315 = vld [vmem:[%s314] sm:$0x1]
        %317 = vrot.lane.b32.xlu0 %v307, 32
        %v318 = vpop.permute.xlu0 %317
        %321 = vrot.lane.b32.xlu0 %v311, 64
        %v322 = vpop.permute.xlu0 %321
        %325 = vrot.lane.b32.xlu0 %v315, 96
        %v326 = vpop.permute.xlu0 %325
        %v328 = vsel %vm133, %v303, %v318
        %v329 = vsel %vm135, %v328, %v322
        %v330 = vsel %vm137, %v329, %v326
        %s331 = sadd.s32 %s104, 7
        %s332 = smul.u32 %s331, 4
        %s333 = sld [smem:[#allocation3 + %s332]]
        %s334 = scalar_lea.vmem %s1, %s333
        %v335 = vld [vmem:[%s334] sm:$0x1]
        %s336 = sadd.s32 %s332, 1
        %s337 = sld [smem:[#allocation3 + %s336]]
        %s338 = scalar_lea.vmem %s1, %s337
        %v339 = vld [vmem:[%s338] sm:$0x1]
        %s340 = sadd.s32 %s332, 2
        %s341 = sld [smem:[#allocation3 + %s340]]
        %s342 = scalar_lea.vmem %s1, %s341
        %v343 = vld [vmem:[%s342] sm:$0x1]
        %s344 = sadd.s32 %s332, 3
        %s345 = sld [smem:[#allocation3 + %s344]]
        %s346 = scalar_lea.vmem %s1, %s345
        %v347 = vld [vmem:[%s346] sm:$0x1]
        %349 = vrot.lane.b32.xlu0 %v339, 32
        %v350 = vpop.permute.xlu0 %349
        %353 = vrot.lane.b32.xlu0 %v343, 64
        %v354 = vpop.permute.xlu0 %353
        %357 = vrot.lane.b32.xlu0 %v347, 96
        %v358 = vpop.permute.xlu0 %357
        %v360 = vsel %vm133, %v335, %v350
        %v361 = vsel %vm135, %v360, %v354
        %v362 = vsel %vm137, %v361, %v358
        %v364 = vrot.slane %v170, 7
        %v367 = vrot.slane %v202, 6
        %v370 = vrot.slane %v234, 5
        %v373 = vrot.slane %v266, 4
        %v376 = vrot.slane %v298, 3
        %v379 = vrot.slane %v330, 2
        %v382 = vrot.slane %v362, 1
        %vm384 = vcmask 1040384
        %v385 = vsel %vm384, %v138, %v364
        %vm386 = vcmask 1041408
        %v387 = vsel %vm386, %v385, %v367
        %vm388 = vcmask 1042432
        %v389 = vsel %vm388, %v387, %v370
        %vm390 = vcmask 1043456
        %v391 = vsel %vm390, %v389, %v373
        %vm392 = vcmask 1044480
        %v393 = vsel %vm392, %v391, %v376
        %vm394 = vcmask 1045504
        %v395 = vsel %vm394, %v393, %v379
        %vm396 = vcmask 1046528
        %v397 = vsel %vm396, %v395, %v382
        %398 = vst [vmem:[%s103] sm:$0xff] %v397
        %s399 = sand.u32 %s53, 1
        %s400 = scalar_lea.sflag [#allocation5], %s399
        %s401 = sand.u32 %s53, 1
        %s402 = smul.addr %s401, 8
        %s403 = scalar_lea.vmem [#allocation4], %s402
        // Predicated region
        $region25: #{tpu_custom_call.1} parent=23 // pred_check
          %p404 = pneg %p63
        $region26: #{tpu_custom_call.1} parent=23 // pred_check_branch
          %406 = sbr.rel (%p404) target = $region28
        $region27: #{tpu_custom_call.1} parent=23 // pred_region
          %408 = vsyncadd %s400, 0
          %s409 = smul.addr %s24, 8
          %s410 = scalar_lea.hbm %s2, %s409
          %s412 = sshll.u32 %s403, 4
          %s413 = int_to_ptr.vmem [resolvable:$true] %s412
          %s414 = sshll.u32 %s410, 4
          %s415 = int_to_ptr.hbm [resolvable:$true] %s414
          %417 = dma.vmem_to_hbm [thread:$0]  %s413, 128, %s415, %s400
        $region28: #{tpu_custom_call.1} parent=23 // pred_fallthru
          _
      $region24: #{tpu_custom_call.1} parent=5 // pred_fallthru
        _
      %p418 = scmp.le.s32.totalorder 2, %s19
      // Predicated region
      $region29: #{tpu_custom_call.1} parent=5 // pred_check
        %p419 = pneg %p418
      $region30: #{tpu_custom_call.1} parent=5 // pred_check_branch
        %421 = sbr.rel (%p419) target = $region32
      $region31: #{tpu_custom_call.1} parent=5 // pred_region
        %s422 = ssub.s32 %s19, 2
        // Predicated region
        $region33: #{tpu_custom_call.1} parent=31 // pred_check
          %p423 = pneg %p69
        $region34: #{tpu_custom_call.1} parent=31 // pred_check_branch
          %425 = sbr.rel (%p423) target = $region36
        $region35: #{tpu_custom_call.1} parent=31 // pred_region
          %s426 = sand.u32 %s54, 1
          %s427 = scalar_lea.sflag [#allocation5], %s426
          %s428 = sand.u32 %s54, 1
          %s429 = smul.addr %s428, 8
          %s430 = scalar_lea.vmem [#allocation4], %s429
          %432 = dma.done %s427, 128
        $region36: #{tpu_custom_call.1} parent=31 // pred_fallthru
          _
      $region32: #{tpu_custom_call.1} parent=5 // pred_fallthru
        _
    $region6: #{tpu_custom_call.1} parent=1 // loop_footer
      %s23 = sadd.s32 1, %s19
    $region7: #{tpu_custom_call.1} parent=1 // loop_footer_branch
      %18 = sbr.rel target = $region3
    $region8: #{tpu_custom_call.1} parent=1 // loop_exit
      _
    %433 = vsyncpa [#allocation5], 1
    %s434 = scalar_lea.sflag [#allocation5], 1
    %435 = vsyncpa %s434, 1

</llo_original>
